<compile_context>
chip_gen: v6e
topology: v6e:2x2x1
jax: 0.10.0
libtpu: 0.0.40
codegen_flags: <defaults>
</compile_context>

<pallas_src>
import functools

import jax
import jax.numpy as jnp
from jax.experimental import pallas as pl
from jax.experimental.pallas import tpu as pltpu


def _smooth_l1(d):
    ad = jnp.abs(d)
    return jnp.where(ad < 1.0, 0.5 * d * d, ad - 0.5)


def _fold_lanes_128(x, w):
    """(8, w) -> (8, 128) by summing lane-aligned 128-wide chunks (pure VPU adds)."""
    part = x[:, 0:128]
    for j in range(1, w // 128):
        part = part + x[:, j * 128:(j + 1) * 128]
    return part


def _pcld_smooth_l1_kernel(params_ref, dpt_ref, gt_ref, *rest,
                           eps, th, w, use_iota, unroll):
    if use_iota:
        (out_ref,) = rest
    else:
        xmap_ref, ymap_ref, out_ref = rest

    hb = pl.program_id(0)   # spatial block axis ("parallel")
    b = pl.program_id(1)    # batch axis ("parallel" -- private output block per (hb, b))

    # Per-batch intrinsics from SMEM: [cx, cy, 1/fx, 1/fy].
    cx = params_ref[b, 0]
    cy = params_ref[b, 1]
    inv_fx = params_ref[b, 2]
    inv_fy = params_ref[b, 3]

    n_slabs = th // 8
    row0 = hb * th

    if use_iota:
        # Hoisted projection coefficients (PVN3D convention: xmap = row idx, ymap = col idx).
        col_idx = jax.lax.broadcasted_iota(jnp.int32, (1, w), 1).astype(jnp.float32)
        ycoef = (col_idx - cx) * inv_fx                                   # (1, w)
        sub8 = jax.lax.broadcasted_iota(jnp.int32, (8, 1), 0).astype(jnp.float32)

    def slab(i, carry):
        loss_acc, cnt_acc = carry
        r = i * 8
        rs = pl.multiple_of(r, 8)

        dpt = dpt_ref[0, pl.ds(rs, 8), :].astype(jnp.float32)             # (8, w)
        gtx = gt_ref[0, 0, pl.ds(rs, 8), :].astype(jnp.float32)
        gty = gt_ref[0, 1, pl.ds(rs, 8), :].astype(jnp.float32)
        gtz = gt_ref[0, 2, pl.ds(rs, 8), :].astype(jnp.float32)

        if use_iota:
            row_idx = (row0 + r).astype(jnp.float32) + sub8               # (8, 1)
            xcoef = (row_idx - cy) * inv_fy
            prow = ycoef * dpt                                            # broadcast mul
            pcol = xcoef * dpt                                            # broadcast mul
        else:
            ym = ymap_ref[pl.ds(rs, 8), :].astype(jnp.float32)
            xm = xmap_ref[pl.ds(rs, 8), :].astype(jnp.float32)
            # Reproduces the reference exactly, including its (ymap-cx)/fx, (xmap-cy)/fy pairing.
            prow = (ym - cx) * dpt * inv_fx
            pcol = (xm - cy) * dpt * inv_fy

        msk = gtz > eps
        l = _smooth_l1(prow - gtx) + _smooth_l1(pcol - gty) + _smooth_l1(dpt - gtz)
        loss_acc = loss_acc + jnp.where(msk, l, 0.0)
        cnt_acc = cnt_acc + jnp.where(msk, 1.0, 0.0)
        return loss_acc, cnt_acc

    zeros = jnp.zeros((8, w), jnp.float32)
    loss_acc, cnt_acc = jax.lax.fori_loop(0, n_slabs, slab, (zeros, zeros),
                                          unroll=unroll)

    # Single lane-dense writeback block per (hb, b): [loss_partial; cnt_partial].
    out_ref[0, 0] = _fold_lanes_128(loss_acc, w)
    out_ref[0, 1] = _fold_lanes_128(cnt_acc, w)


def _vmem_capacity_bytes():
    try:
        info = pltpu.get_tpu_info()
        cap = getattr(info, "vmem_capacity_bytes", None)
        if cap:
            return int(cap)
    except Exception:
        pass
    return 64 << 20   # conservative: v7x physical VMEM per TensorCore


def _pick_block_h(h, w, per_pixel_bytes, budget_bytes, row_align, prefer_split):
    """Largest divisor of h (multiple of row_align) whose double-buffered inputs fit budget."""
    if h % row_align != 0:
        row_align = 8
    cands = [th for th in range(row_align, h + 1, row_align)
             if h % th == 0 and 2 * th * w * per_pixel_bytes <= budget_bytes]
    if not cands:
        return row_align
    if prefer_split:
        multi = [th for th in cands if h // th >= 2]   # keep >=2 grid steps when bs == 1
        if multi:
            return max(multi)
    return max(cands)


def pcld_smooth_l1_loss(pred, gt, K, xmap=None, ymap=None, eps=1e-5, *,
                        gt_channels_first=False, block_h=None):
    """PVN3D PcldSmoothL1Loss forward.

    pred: (bs, 1, h, w) depth
    gt:   (bs, h, w, 3) point cloud, or (bs, 3, h, w) if gt_channels_first=True
          (channels-first avoids a glue transpose that costs ~1.5x the kernel's HBM traffic)
    K:    (bs, 3, 3) intrinsics
    xmap/ymap: (h, w) pixel maps (any float dtype; bf16 halves their HBM traffic); pass None
          to use the standard index grids (xmap[r, c] = r, ymap[r, c] = c) generated in-kernel.
    """
    bs, _, h, w = pred.shape
    assert w % 128 == 0, "w must be a multiple of 128 (lane dim)"
    assert h % 8 == 0, "h must be a multiple of 8"
    # TODO(synk): pad h/w for shapes that are not multiples of (8, 128) and exclude the
    # padded pixels from both the loss and the count accumulators.
    assert (xmap is None) == (ymap is None), "pass both xmap and ymap, or neither"
    use_iota = xmap is None

    dpt = pred.reshape(bs, h, w)                       # free reshape, native dtype
    if gt_channels_first:
        gt_cf = gt                                     # zero-copy fast path
    else:
        # Top remaining HBM cost: this transpose reads+writes 3*h*w*bs elements.
        # Produce gt channels-first upstream and pass gt_channels_first=True to remove it.
        gt_cf = jnp.transpose(gt, (0, 3, 1, 2))        # (bs, 3, h, w), native dtype

    Kf = K.astype(jnp.float32)
    params = jnp.stack(
        [Kf[:, 0, 2], Kf[:, 1, 2], 1.0 / Kf[:, 0, 0], 1.0 / Kf[:, 1, 1]], axis=1)

    itemsizes = [dpt.dtype.itemsize, gt_cf.dtype.itemsize]
    per_pixel = dpt.dtype.itemsize + 3 * gt_cf.dtype.itemsize
    if not use_iota:
        xmap = jnp.asarray(xmap)
        ymap = jnp.asarray(ymap)
        itemsizes += [xmap.dtype.itemsize, ymap.dtype.itemsize]
        per_pixel += xmap.dtype.itemsize + ymap.dtype.itemsize
    # Sub-32-bit dtypes pack rows along sublanes: keep block height a packing multiple.
    row_align = 8 * (4 // min(itemsizes))

    cap = _vmem_capacity_bytes()
    budget = int(cap * 0.55)                           # double-buffered input blocks budget

    if block_h is not None:
        th = block_h
        assert th % 8 == 0 and h % th == 0
    else:
        th = _pick_block_h(h, w, per_pixel, budget, row_align, prefer_split=(bs == 1))
    n_h = h // th
    n_slabs = th // 8
    unroll = True if n_slabs <= 8 else 4

    # Raise the scoped VMEM limit so the large tiles compile on v5e (16 MiB default),
    # capped below physical (v7x: 64 MiB) with headroom for compiler scratch.
    est_in = 2 * per_pixel * th * w
    vmem_limit = int(min(cap - (4 << 20), max(est_in + (16 << 20), 32 << 20)))

    kernel = functools.partial(_pcld_smooth_l1_kernel,
                               eps=float(eps), th=th, w=w,
                               use_iota=use_iota, unroll=unroll)

    in_specs = [
        pl.BlockSpec(memory_space=pltpu.MemorySpace.SMEM),          # params (bs, 4)
        pl.BlockSpec((1, th, w), lambda hb, b: (b, hb, 0)),         # depth
        pl.BlockSpec((1, 3, th, w), lambda hb, b: (b, 0, hb, 0)),   # gt (channels-first)
    ]
    args = [params, dpt, gt_cf]
    if not use_iota:
        in_specs += [pl.BlockSpec((th, w), lambda hb, b: (hb, 0)),  # xmap
                     pl.BlockSpec((th, w), lambda hb, b: (hb, 0))]  # ymap
        args += [xmap, ymap]

    out = pl.pallas_call(
        kernel,
        out_shape=jax.ShapeDtypeStruct((n_h * bs, 2, 8, 128), jnp.float32),
        grid=(n_h, bs),
        in_specs=in_specs,
        out_specs=pl.BlockSpec((1, 2, 8, 128), lambda hb, b: (hb * bs + b, 0, 0, 0)),
        compiler_params=pltpu.CompilerParams(
            dimension_semantics=("parallel", "parallel"),
            vmem_limit_bytes=vmem_limit),
    )(*args)

    # Tiny final reduction + normalization in plain JAX (matches the reference,
    # including NaN when no pixel passes the z > eps mask).
    sums = jnp.sum(out, axis=(0, 2, 3))                # (2,) -> [sum(loss), sum(cnt)]
    return sums[0] / sums[1] * bs


def _reference_loss(pred, gt, K, xmap, ymap, eps=1e-5):
    bs, _, h, w = pred.shape
    dpt = pred.reshape(bs, h, w).astype(jnp.float32)
    K = K.astype(jnp.float32)
    cx = K[:, 0, 2][:, None, None]
    cy = K[:, 1, 2][:, None, None]
    fx = K[:, 0, 0][:, None, None]
    fy = K[:, 1, 1][:, None, None]
    row = (ymap - cx) * dpt / fx
    col = (xmap - cy) * dpt / fy
    pcld = jnp.stack([row, col, dpt], axis=-1)
    gt = gt.astype(jnp.float32)
    msk = gt[..., 2] > eps
    d = pcld - gt
    sl1 = jnp.where(jnp.abs(d) < 1.0, 0.5 * d * d, jnp.abs(d) - 0.5)
    s = jnp.sum(sl1 * msk[..., None].astype(jnp.float32))
    return s / jnp.sum(msk.astype(jnp.float32)) * bs


if __name__ == "__main__":
    key = jax.random.PRNGKey(0)
    bs, h, w = 2, 16, 256

    k1, k2, k3, k4 = jax.random.split(key, 4)
    pred = jax.random.uniform(k1, (bs, 1, h, w), jnp.float32, 0.5, 2.0)
    # gt z has a mix of values above / below eps so the mask is exercised.
    gt = jax.random.uniform(k2, (bs, h, w, 3), jnp.float32, -1.0, 2.0)

    fx = jnp.array([100.0, 120.0], jnp.float32)
    fy = jnp.array([110.0, 130.0], jnp.float32)
    cx = jnp.full((bs,), w / 2.0, jnp.float32)
    cy = jnp.full((bs,), h / 2.0, jnp.float32)
    K = jnp.zeros((bs, 3, 3), jnp.float32)
    K = (K.at[:, 0, 0].set(fx).at[:, 1, 1].set(fy)
          .at[:, 0, 2].set(cx).at[:, 1, 2].set(cy).at[:, 2, 2].set(1.0))

    # Standard pixel-index grids (PVN3D convention: xmap = row index, ymap = col index).
    xmap_grid = jnp.broadcast_to(jnp.arange(h, dtype=jnp.float32)[:, None], (h, w))
    ymap_grid = jnp.broadcast_to(jnp.arange(w, dtype=jnp.float32)[None, :], (h, w))
    # Arbitrary maps to exercise the explicit-map path.
    xmap_arb = jax.random.uniform(k3, (h, w), jnp.float32, 0.0, float(h))
    ymap_arb = jax.random.uniform(k4, (h, w), jnp.float32, 0.0, float(w))

    # 1) Explicit (arbitrary) maps -- exact module semantics.
    loss_arb = jax.block_until_ready(pcld_smooth_l1_loss(pred, gt, K, xmap_arb, ymap_arb))
    ref_arb = _reference_loss(pred, gt, K, xmap_arb, ymap_arb)
    assert jnp.allclose(loss_arb, ref_arb, rtol=1e-4, atol=1e-4), (float(loss_arb), float(ref_arb))

    # 2) In-kernel iota maps (fast path) == reference with the standard index grids.
    loss_iota = jax.block_until_ready(pcld_smooth_l1_loss(pred, gt, K))
    ref_grid = _reference_loss(pred, gt, K, xmap_grid, ymap_grid)
    assert jnp.allclose(loss_iota, ref_grid, rtol=1e-4, atol=1e-4), (float(loss_iota), float(ref_grid))

    # 3) Channels-first gt fast path (no transpose copy in glue).
    gt_cf = jnp.transpose(gt, (0, 3, 1, 2))
    loss_cf = jax.block_until_ready(
        pcld_smooth_l1_loss(pred, gt_cf, K, gt_channels_first=True))
    assert jnp.allclose(loss_cf, ref_grid, rtol=1e-4, atol=1e-4), (float(loss_cf), float(ref_grid))

    # 4) Forced multi-block spatial grid to exercise the hb axis.
    loss_blk = jax.block_until_ready(pcld_smooth_l1_loss(pred, gt, K, block_h=8))
    assert jnp.allclose(loss_blk, ref_grid, rtol=1e-4, atol=1e-4), (float(loss_blk), float(ref_grid))

    print("KERNEL_OK")
</pallas_src>

<mosaic_0001>
module attributes {stable_mosaic.version = 11 : i64} {
  func.func @_pcld_smooth_l1_kernel(%arg0: i32, %arg1: i32, %arg2: memref<2x4xf32, #tpu.memory_space<smem>>, %arg3: memref<1x16x256xf32, #tpu.memory_space<vmem>>, %arg4: memref<1x3x16x256xf32, #tpu.memory_space<vmem>>, %arg5: memref<16x256xf32, #tpu.memory_space<vmem>>, %arg6: memref<16x256xf32, #tpu.memory_space<vmem>>, %arg7: memref<1x2x8x128xf32, #tpu.memory_space<vmem>>) attributes {dimension_semantics = [#tpu.dimension_semantics<parallel>, #tpu.dimension_semantics<parallel>], iteration_bounds = array<i64: 1, 2>, scalar_prefetch = 0 : i64, scratch_operands = 0 : i64, tpu.core_type = #tpu.core_type<tc>, window_params = [{transform_indices = @transform_0, window_bounds = array<i64: 2, 4>}, {transform_indices = @transform_1, window_bounds = array<i64: 1, 16, 256>}, {transform_indices = @transform_2, window_bounds = array<i64: 1, 3, 16, 256>}, {transform_indices = @transform_3, window_bounds = array<i64: 16, 256>}, {transform_indices = @transform_4, window_bounds = array<i64: 16, 256>}, {transform_indices = @transform_5, window_bounds = array<i64: 1, 2, 8, 128>}]} {
    %0 = arith.index_cast %arg1 : i32 to index
    %c0 = arith.constant 0 : index
    %1 = memref.load %arg2[%0, %c0] : memref<2x4xf32, #tpu.memory_space<smem>>
    %2 = arith.index_cast %arg1 : i32 to index
    %c1 = arith.constant 1 : index
    %3 = memref.load %arg2[%2, %c1] : memref<2x4xf32, #tpu.memory_space<smem>>
    %4 = arith.index_cast %arg1 : i32 to index
    %c2 = arith.constant 2 : index
    %5 = memref.load %arg2[%4, %c2] : memref<2x4xf32, #tpu.memory_space<smem>>
    %6 = arith.index_cast %arg1 : i32 to index
    %c3 = arith.constant 3 : index
    %7 = memref.load %arg2[%6, %c3] : memref<2x4xf32, #tpu.memory_space<smem>>
    %cst = arith.constant 0.000000e+00 : f32
    %8 = vector.broadcast %cst : f32 to vector<8x256xf32>
    %c0_i32 = arith.constant 0 : i32
    %c8_i32 = arith.constant 8 : i32
    %9 = arith.muli %c0_i32, %c8_i32 : i32
    %10 = tpu.assume_multiple %9, 8 : i32
    %c0_0 = arith.constant 0 : index
    %11 = arith.index_cast %10 : i32 to index
    %c0_1 = arith.constant 0 : index
    %12 = vector.load %arg3[%c0_0, %11, %c0_1] : memref<1x16x256xf32, #tpu.memory_space<vmem>>, vector<1x8x256xf32>
    %13 = vector.shape_cast %12 : vector<1x8x256xf32> to vector<8x256xf32>
    %c0_2 = arith.constant 0 : index
    %c0_3 = arith.constant 0 : index
    %14 = arith.index_cast %10 : i32 to index
    %c0_4 = arith.constant 0 : index
    %15 = vector.load %arg4[%c0_2, %c0_3, %14, %c0_4] : memref<1x3x16x256xf32, #tpu.memory_space<vmem>>, vector<1x1x8x256xf32>
    %16 = vector.shape_cast %15 : vector<1x1x8x256xf32> to vector<8x256xf32>
    %c0_5 = arith.constant 0 : index
    %c1_6 = arith.constant 1 : index
    %17 = arith.index_cast %10 : i32 to index
    %c0_7 = arith.constant 0 : index
    %18 = vector.load %arg4[%c0_5, %c1_6, %17, %c0_7] : memref<1x3x16x256xf32, #tpu.memory_space<vmem>>, vector<1x1x8x256xf32>
    %19 = vector.shape_cast %18 : vector<1x1x8x256xf32> to vector<8x256xf32>
    %c0_8 = arith.constant 0 : index
    %c2_9 = arith.constant 2 : index
    %20 = arith.index_cast %10 : i32 to index
    %c0_10 = arith.constant 0 : index
    %21 = vector.load %arg4[%c0_8, %c2_9, %20, %c0_10] : memref<1x3x16x256xf32, #tpu.memory_space<vmem>>, vector<1x1x8x256xf32>
    %22 = vector.shape_cast %21 : vector<1x1x8x256xf32> to vector<8x256xf32>
    %23 = arith.index_cast %10 : i32 to index
    %c0_11 = arith.constant 0 : index
    %24 = vector.load %arg6[%23, %c0_11] : memref<16x256xf32, #tpu.memory_space<vmem>>, vector<8x256xf32>
    %25 = arith.index_cast %10 : i32 to index
    %c0_12 = arith.constant 0 : index
    %26 = vector.load %arg5[%25, %c0_12] : memref<16x256xf32, #tpu.memory_space<vmem>>, vector<8x256xf32>
    %27 = vector.broadcast %1 : f32 to vector<8x256xf32>
    %28 = arith.subf %24, %27 : vector<8x256xf32>
    %29 = arith.mulf %28, %13 : vector<8x256xf32>
    %30 = vector.broadcast %5 : f32 to vector<8x256xf32>
    %31 = arith.mulf %29, %30 : vector<8x256xf32>
    %32 = vector.broadcast %3 : f32 to vector<8x256xf32>
    %33 = arith.subf %26, %32 : vector<8x256xf32>
    %34 = arith.mulf %33, %13 : vector<8x256xf32>
    %35 = vector.broadcast %7 : f32 to vector<8x256xf32>
    %36 = arith.mulf %34, %35 : vector<8x256xf32>
    %cst_13 = arith.constant 9.99999974E-6 : f32
    %37 = vector.broadcast %cst_13 : f32 to vector<8x256xf32>
    %38 = arith.cmpf ogt, %22, %37 : vector<8x256xf32>
    %39 = arith.subf %31, %16 : vector<8x256xf32>
    %40 = math.absf %39 : vector<8x256xf32>
    %cst_14 = arith.constant 1.000000e+00 : f32
    %41 = vector.broadcast %cst_14 : f32 to vector<8x256xf32>
    %42 = arith.cmpf olt, %40, %41 : vector<8x256xf32>
    %cst_15 = arith.constant 5.000000e-01 : f32
    %43 = vector.broadcast %cst_15 : f32 to vector<8x256xf32>
    %44 = arith.mulf %43, %39 : vector<8x256xf32>
    %45 = arith.mulf %44, %39 : vector<8x256xf32>
    %cst_16 = arith.constant 5.000000e-01 : f32
    %46 = vector.broadcast %cst_16 : f32 to vector<8x256xf32>
    %47 = arith.subf %40, %46 : vector<8x256xf32>
    %48 = arith.select %42, %45, %47 : vector<8x256xi1>, vector<8x256xf32>
    %49 = arith.subf %36, %19 : vector<8x256xf32>
    %50 = math.absf %49 : vector<8x256xf32>
    %cst_17 = arith.constant 1.000000e+00 : f32
    %51 = vector.broadcast %cst_17 : f32 to vector<8x256xf32>
    %52 = arith.cmpf olt, %50, %51 : vector<8x256xf32>
    %cst_18 = arith.constant 5.000000e-01 : f32
    %53 = vector.broadcast %cst_18 : f32 to vector<8x256xf32>
    %54 = arith.mulf %53, %49 : vector<8x256xf32>
    %55 = arith.mulf %54, %49 : vector<8x256xf32>
    %cst_19 = arith.constant 5.000000e-01 : f32
    %56 = vector.broadcast %cst_19 : f32 to vector<8x256xf32>
    %57 = arith.subf %50, %56 : vector<8x256xf32>
    %58 = arith.select %52, %55, %57 : vector<8x256xi1>, vector<8x256xf32>
    %59 = arith.addf %48, %58 : vector<8x256xf32>
    %60 = arith.subf %13, %22 : vector<8x256xf32>
    %61 = math.absf %60 : vector<8x256xf32>
    %cst_20 = arith.constant 1.000000e+00 : f32
    %62 = vector.broadcast %cst_20 : f32 to vector<8x256xf32>
    %63 = arith.cmpf olt, %61, %62 : vector<8x256xf32>
    %cst_21 = arith.constant 5.000000e-01 : f32
    %64 = vector.broadcast %cst_21 : f32 to vector<8x256xf32>
    %65 = arith.mulf %64, %60 : vector<8x256xf32>
    %66 = arith.mulf %65, %60 : vector<8x256xf32>
    %cst_22 = arith.constant 5.000000e-01 : f32
    %67 = vector.broadcast %cst_22 : f32 to vector<8x256xf32>
    %68 = arith.subf %61, %67 : vector<8x256xf32>
    %69 = arith.select %63, %66, %68 : vector<8x256xi1>, vector<8x256xf32>
    %70 = arith.addf %59, %69 : vector<8x256xf32>
    %cst_23 = arith.constant 0.000000e+00 : f32
    %71 = vector.broadcast %cst_23 : f32 to vector<8x256xf32>
    %72 = arith.select %38, %70, %71 : vector<8x256xi1>, vector<8x256xf32>
    %73 = arith.addf %8, %72 : vector<8x256xf32>
    %cst_24 = arith.constant 1.000000e+00 : f32
    %cst_25 = arith.constant 0.000000e+00 : f32
    %74 = vector.broadcast %cst_24 : f32 to vector<8x256xf32>
    %75 = vector.broadcast %cst_25 : f32 to vector<8x256xf32>
    %76 = arith.select %38, %74, %75 : vector<8x256xi1>, vector<8x256xf32>
    %77 = arith.addf %8, %76 : vector<8x256xf32>
    %c1_i32 = arith.constant 1 : i32
    %c8_i32_26 = arith.constant 8 : i32
    %78 = arith.muli %c1_i32, %c8_i32_26 : i32
    %79 = tpu.assume_multiple %78, 8 : i32
    %c0_27 = arith.constant 0 : index
    %80 = arith.index_cast %79 : i32 to index
    %c0_28 = arith.constant 0 : index
    %81 = vector.load %arg3[%c0_27, %80, %c0_28] : memref<1x16x256xf32, #tpu.memory_space<vmem>>, vector<1x8x256xf32>
    %82 = vector.shape_cast %81 : vector<1x8x256xf32> to vector<8x256xf32>
    %c0_29 = arith.constant 0 : index
    %c0_30 = arith.constant 0 : index
    %83 = arith.index_cast %79 : i32 to index
    %c0_31 = arith.constant 0 : index
    %84 = vector.load %arg4[%c0_29, %c0_30, %83, %c0_31] : memref<1x3x16x256xf32, #tpu.memory_space<vmem>>, vector<1x1x8x256xf32>
    %85 = vector.shape_cast %84 : vector<1x1x8x256xf32> to vector<8x256xf32>
    %c0_32 = arith.constant 0 : index
    %c1_33 = arith.constant 1 : index
    %86 = arith.index_cast %79 : i32 to index
    %c0_34 = arith.constant 0 : index
    %87 = vector.load %arg4[%c0_32, %c1_33, %86, %c0_34] : memref<1x3x16x256xf32, #tpu.memory_space<vmem>>, vector<1x1x8x256xf32>
    %88 = vector.shape_cast %87 : vector<1x1x8x256xf32> to vector<8x256xf32>
    %c0_35 = arith.constant 0 : index
    %c2_36 = arith.constant 2 : index
    %89 = arith.index_cast %79 : i32 to index
    %c0_37 = arith.constant 0 : index
    %90 = vector.load %arg4[%c0_35, %c2_36, %89, %c0_37] : memref<1x3x16x256xf32, #tpu.memory_space<vmem>>, vector<1x1x8x256xf32>
    %91 = vector.shape_cast %90 : vector<1x1x8x256xf32> to vector<8x256xf32>
    %92 = arith.index_cast %79 : i32 to index
    %c0_38 = arith.constant 0 : index
    %93 = vector.load %arg6[%92, %c0_38] : memref<16x256xf32, #tpu.memory_space<vmem>>, vector<8x256xf32>
    %94 = arith.index_cast %79 : i32 to index
    %c0_39 = arith.constant 0 : index
    %95 = vector.load %arg5[%94, %c0_39] : memref<16x256xf32, #tpu.memory_space<vmem>>, vector<8x256xf32>
    %96 = vector.broadcast %1 : f32 to vector<8x256xf32>
    %97 = arith.subf %93, %96 : vector<8x256xf32>
    %98 = arith.mulf %97, %82 : vector<8x256xf32>
    %99 = vector.broadcast %5 : f32 to vector<8x256xf32>
    %100 = arith.mulf %98, %99 : vector<8x256xf32>
    %101 = vector.broadcast %3 : f32 to vector<8x256xf32>
    %102 = arith.subf %95, %101 : vector<8x256xf32>
    %103 = arith.mulf %102, %82 : vector<8x256xf32>
    %104 = vector.broadcast %7 : f32 to vector<8x256xf32>
    %105 = arith.mulf %103, %104 : vector<8x256xf32>
    %cst_40 = arith.constant 9.99999974E-6 : f32
    %106 = vector.broadcast %cst_40 : f32 to vector<8x256xf32>
    %107 = arith.cmpf ogt, %91, %106 : vector<8x256xf32>
    %108 = arith.subf %100, %85 : vector<8x256xf32>
    %109 = math.absf %108 : vector<8x256xf32>
    %cst_41 = arith.constant 1.000000e+00 : f32
    %110 = vector.broadcast %cst_41 : f32 to vector<8x256xf32>
    %111 = arith.cmpf olt, %109, %110 : vector<8x256xf32>
    %cst_42 = arith.constant 5.000000e-01 : f32
    %112 = vector.broadcast %cst_42 : f32 to vector<8x256xf32>
    %113 = arith.mulf %112, %108 : vector<8x256xf32>
    %114 = arith.mulf %113, %108 : vector<8x256xf32>
    %cst_43 = arith.constant 5.000000e-01 : f32
    %115 = vector.broadcast %cst_43 : f32 to vector<8x256xf32>
    %116 = arith.subf %109, %115 : vector<8x256xf32>
    %117 = arith.select %111, %114, %116 : vector<8x256xi1>, vector<8x256xf32>
    %118 = arith.subf %105, %88 : vector<8x256xf32>
    %119 = math.absf %118 : vector<8x256xf32>
    %cst_44 = arith.constant 1.000000e+00 : f32
    %120 = vector.broadcast %cst_44 : f32 to vector<8x256xf32>
    %121 = arith.cmpf olt, %119, %120 : vector<8x256xf32>
    %cst_45 = arith.constant 5.000000e-01 : f32
    %122 = vector.broadcast %cst_45 : f32 to vector<8x256xf32>
    %123 = arith.mulf %122, %118 : vector<8x256xf32>
    %124 = arith.mulf %123, %118 : vector<8x256xf32>
    %cst_46 = arith.constant 5.000000e-01 : f32
    %125 = vector.broadcast %cst_46 : f32 to vector<8x256xf32>
    %126 = arith.subf %119, %125 : vector<8x256xf32>
    %127 = arith.select %121, %124, %126 : vector<8x256xi1>, vector<8x256xf32>
    %128 = arith.addf %117, %127 : vector<8x256xf32>
    %129 = arith.subf %82, %91 : vector<8x256xf32>
    %130 = math.absf %129 : vector<8x256xf32>
    %cst_47 = arith.constant 1.000000e+00 : f32
    %131 = vector.broadcast %cst_47 : f32 to vector<8x256xf32>
    %132 = arith.cmpf olt, %130, %131 : vector<8x256xf32>
    %cst_48 = arith.constant 5.000000e-01 : f32
    %133 = vector.broadcast %cst_48 : f32 to vector<8x256xf32>
    %134 = arith.mulf %133, %129 : vector<8x256xf32>
    %135 = arith.mulf %134, %129 : vector<8x256xf32>
    %cst_49 = arith.constant 5.000000e-01 : f32
    %136 = vector.broadcast %cst_49 : f32 to vector<8x256xf32>
    %137 = arith.subf %130, %136 : vector<8x256xf32>
    %138 = arith.select %132, %135, %137 : vector<8x256xi1>, vector<8x256xf32>
    %139 = arith.addf %128, %138 : vector<8x256xf32>
    %cst_50 = arith.constant 0.000000e+00 : f32
    %140 = vector.broadcast %cst_50 : f32 to vector<8x256xf32>
    %141 = arith.select %107, %139, %140 : vector<8x256xi1>, vector<8x256xf32>
    %142 = arith.addf %73, %141 : vector<8x256xf32>
    %cst_51 = arith.constant 1.000000e+00 : f32
    %cst_52 = arith.constant 0.000000e+00 : f32
    %143 = vector.broadcast %cst_51 : f32 to vector<8x256xf32>
    %144 = vector.broadcast %cst_52 : f32 to vector<8x256xf32>
    %145 = arith.select %107, %143, %144 : vector<8x256xi1>, vector<8x256xf32>
    %146 = arith.addf %77, %145 : vector<8x256xf32>
    %c2_i32 = arith.constant 2 : i32
    %147 = vector.extract_strided_slice %142 {offsets = [0, 0], sizes = [8, 128], strides = [1, 1]} : vector<8x256xf32> to vector<8x128xf32>
    %148 = vector.extract_strided_slice %142 {offsets = [0, 128], sizes = [8, 128], strides = [1, 1]} : vector<8x256xf32> to vector<8x128xf32>
    %149 = arith.addf %147, %148 : vector<8x128xf32>
    %c0_53 = arith.constant 0 : index
    %c0_54 = arith.constant 0 : index
    %c0_55 = arith.constant 0 : index
    %c0_56 = arith.constant 0 : index
    %150 = vector.load %arg7[%c0_53, %c0_54, %c0_55, %c0_56] : memref<1x2x8x128xf32, #tpu.memory_space<vmem>>, vector<1x1x8x128xf32>
    %151 = vector.shape_cast %150 : vector<1x1x8x128xf32> to vector<8x128xf32>
    %152 = vector.shape_cast %149 : vector<8x128xf32> to vector<1x1x8x128xf32>
    tpu.vector_store %arg7[%c0_53, %c0_54, %c0_55, %c0_56], %152 {strides = array<i32>} : memref<1x2x8x128xf32, #tpu.memory_space<vmem>>, vector<1x1x8x128xf32>,
    %153 = vector.extract_strided_slice %146 {offsets = [0, 0], sizes = [8, 128], strides = [1, 1]} : vector<8x256xf32> to vector<8x128xf32>
    %154 = vector.extract_strided_slice %146 {offsets = [0, 128], sizes = [8, 128], strides = [1, 1]} : vector<8x256xf32> to vector<8x128xf32>
    %155 = arith.addf %153, %154 : vector<8x128xf32>
    %c0_57 = arith.constant 0 : index
    %c1_58 = arith.constant 1 : index
    %c0_59 = arith.constant 0 : index
    %c0_60 = arith.constant 0 : index
    %156 = vector.load %arg7[%c0_57, %c1_58, %c0_59, %c0_60] : memref<1x2x8x128xf32, #tpu.memory_space<vmem>>, vector<1x1x8x128xf32>
    %157 = vector.shape_cast %156 : vector<1x1x8x128xf32> to vector<8x128xf32>
    %158 = vector.shape_cast %155 : vector<8x128xf32> to vector<1x1x8x128xf32>
    tpu.vector_store %arg7[%c0_57, %c1_58, %c0_59, %c0_60], %158 {strides = array<i32>} : memref<1x2x8x128xf32, #tpu.memory_space<vmem>>, vector<1x1x8x128xf32>,
    return
  }
  func.func @transform_0(%arg0: i32, %arg1: i32) -> (i32, i32) {
    %c0_i32 = arith.constant 0 : i32
    %c0_i32_0 = arith.constant 0 : i32
    %c0_i32_1 = arith.constant 0 : i32
    return %c0_i32, %c0_i32_0 : i32, i32
  }
  func.func @transform_1(%arg0: i32, %arg1: i32) -> (i32, i32, i32) {
    %c0_i32 = arith.constant 0 : i32
    %c0_i32_0 = arith.constant 0 : i32
    return %arg1, %arg0, %c0_i32 : i32, i32, i32
  }
  func.func @transform_2(%arg0: i32, %arg1: i32) -> (i32, i32, i32, i32) {
    %c0_i32 = arith.constant 0 : i32
    %c0_i32_0 = arith.constant 0 : i32
    %c0_i32_1 = arith.constant 0 : i32
    return %arg1, %c0_i32, %arg0, %c0_i32_0 : i32, i32, i32, i32
  }
  func.func @transform_3(%arg0: i32, %arg1: i32) -> (i32, i32) {
    %c0_i32 = arith.constant 0 : i32
    %c0_i32_0 = arith.constant 0 : i32
    return %arg0, %c0_i32 : i32, i32
  }
  func.func @transform_4(%arg0: i32, %arg1: i32) -> (i32, i32) {
    %c0_i32 = arith.constant 0 : i32
    %c0_i32_0 = arith.constant 0 : i32
    return %arg0, %c0_i32 : i32, i32
  }
  func.func @transform_5(%arg0: i32, %arg1: i32) -> (i32, i32, i32, i32) {
    %c2_i32 = arith.constant 2 : i32
    %0 = arith.muli %arg0, %c2_i32 : i32
    %1 = arith.addi %0, %arg1 : i32
    %c0_i32 = arith.constant 0 : i32
    %c0_i32_0 = arith.constant 0 : i32
    %c0_i32_1 = arith.constant 0 : i32
    %c0_i32_2 = arith.constant 0 : i32
    return %1, %c0_i32, %c0_i32_0, %c0_i32_1 : i32, i32, i32, i32
  }
}

</mosaic_0001>

<llo_original>
// kernel: tpu_custom_call.1
$region0: #{tpu_custom_call.1}
  #allocation0 [shape = 'u32[]', space=smem, size = 0x4, offset = 0x4, fixed_abs, tag = 'smem constant byte address 0x4 - core index']
  #allocation1 [shape = 'u32[144,128]{1,0:T(1,128)}', space=vmem, size = 0x12000, scoped, tag = 'internal scratch']
  %s0 = inlined_call_operand.hbm [shape: f32[2,4], index: 0, kind: input, shape index: {}]
  %s1 = inlined_call_operand.hbm [shape: f32[2,16,256], index: 1, kind: input, shape index: {}]
  %s2 = inlined_call_operand.hbm [shape: f32[2,3,16,256], index: 2, kind: input, shape index: {}]
  %s3 = inlined_call_operand.hbm [shape: f32[16,256], index: 3, kind: input, shape index: {}]
  %s4 = inlined_call_operand.hbm [shape: f32[16,256], index: 4, kind: input, shape index: {}]
  %s5 = inlined_call_operand.hbm [shape: f32[2,2,8,128], index: 5, kind: output, shape index: {}]
  %s6 = sld [smem:[#allocation0]]
  $region73: #{tpu_custom_call.1} parent=0
    _
  %s8 = ssub.s32 1, %s6
  %s9 = scalar_select 0, %s8, %s6
  $region1: #{tpu_custom_call.1} parent=0
    #allocation2 [shape = 'u8[1024]{0}', space=smem, size = 0x400, scoped, tag = 'input window, operand 0, single buffered']
    #allocation3 [shape = 's32[2]{0}', space=sflag, size = 0x8, scoped, tag = 'scoped memory for tpu_custom_call.1']
    #allocation4 [shape = 's32[2]{0}', space=sflag, size = 0x8, scoped, tag = 'scoped memory for tpu_custom_call.1']
    #allocation5 [shape = 's32[2]{0}', space=sflag, size = 0x8, scoped, tag = 'scoped memory for tpu_custom_call.1']
    #allocation6 [shape = 'u8[32768]{0}', space=vmem, size = 0x8000, scoped, tag = 'input window, operand 1']
    #allocation7 [shape = 'u8[98304]{0}', space=vmem, size = 0x18000, scoped, tag = 'input window, operand 2']
    #allocation8 [shape = 's32[2]{0}', space=sflag, size = 0x8, scoped, tag = 'scoped memory for tpu_custom_call.1']
    #allocation9 [shape = 'u8[16384]{0}', space=vmem, size = 0x4000, scoped, tag = 'input window, operand 3, single buffered']
    #allocation10 [shape = 'u8[16384]{0}', space=vmem, size = 0x4000, scoped, tag = 'input window, operand 4, single buffered']
    #allocation11 [shape = 's32[1]{0}', space=sflag, size = 0x4, scoped, tag = 'scoped memory for tpu_custom_call.1']
    #allocation12 [shape = 'u8[16384]{0}', space=vmem, size = 0x4000, scoped, tag = 'output window, operand 0']
    %10 = vsyncpa [#allocation5], 0
    %11 = vsyncpa [#allocation3], 0
    %s12 = scalar_lea.sflag [#allocation3], 1
    %13 = vsyncpa %s12, 0
    %14 = vsyncpa [#allocation8], 0
    %s15 = scalar_lea.sflag [#allocation8], 1
    %16 = vsyncpa %s15, 0
    %17 = vsyncpa [#allocation11], 0
    %18 = vsyncpa [#allocation4], 0
    %s19 = scalar_lea.sflag [#allocation4], 1
    %20 = vsyncpa %s19, 0
    loop: start=0, step=1, limit=4
    $region2: #{tpu_custom_call.1} parent=1 // loop_pre_header
      _
    $region3: #{tpu_custom_call.1} parent=1 // loop_header
      %s22 = sphi 0, %s26
      %p23 = scmp.ge.s32.totalorder %s22, 4
      %s29 = sphi 0, %s41
      %s30 = sphi 0, %s37
      %s31 = sphi 0, %s29
      %s32 = sphi 0, %s30
      %s33 = sphi 0, %s31
      %s34 = sphi 0, %s32
      %s42 = sphi 0, %s42
      %s44 = sphi 0, %s42
      %s45 = sphi 0, %s44
      %s59 = sphi 0, %s45
      %s67 = sphi 0, %s69
      %s70 = sphi 0, %s67
      %s71 = sphi 0, %s70
      %s87 = sphi 0, %s71
      %s95 = sphi 0, %s97
      %s98 = sphi 0, %s95
      %s99 = sphi 0, %s98
      %s115 = sphi 0, %s99
      %s121 = sphi 0, %s123
      %s124 = sphi 0, %s121
      %s125 = sphi 0, %s124
      %s141 = sphi 0, %s125
      %s147 = sphi 0, %s149
      %s150 = sphi 0, %s147
      %s151 = sphi 0, %s150
      %s167 = sphi 0, %s151
      %s177 = sphi 0, %s179
      %s180 = sphi 0, %s177
      %s181 = sphi 0, %s180
      %s197 = sphi 0, %s181
    $region4: #{tpu_custom_call.1} parent=1 // loop_header_branch
      %25 = sbr.rel (%p23) target = $region8
    $region5: #{tpu_custom_call.1} parent=1 // loop_body
      %s27 = ssub.s32 %s22, 1
      %s28 = ssub.s32 %s22, 2
      %s35 = sadd.s32 1, %s30
      %p36 = scmp.ge.s32.totalorder %s35, 2
      %s37 = scalar_select %p36, 0, %s35
      %s38 = sadd.s32 1, %s29
      %s39 = scalar_select %p36, %s38, %s29
      %p40 = scmp.ge.s32.totalorder %s39, 1
      %s41 = scalar_select %p40, 0, %s39
      %s43 = sadd.s32 %s42, 1
      %p46 = scmp.eq.s32.totalorder %s22, 1
      %p47 = scmp.ne.s32.totalorder %s42, %s44
      %p48 = scmp.eq.s32.totalorder %s22, 0
      %p49 = por %p47, %p48
      %p50 = scmp.ne.s32.totalorder %s42, %s44
      %p51 = scmp.eq.s32.totalorder %s27, 1
      %p52 = por %p50, %p51
      %p53 = scmp.ne.s32.totalorder %s44, %s45
      %p54 = scmp.eq.s32.totalorder %s27, 0
      %p55 = por %p53, %p54
      %p56 = scmp.ne.s32.totalorder %s44, %s45
      %p57 = scmp.eq.s32.totalorder %s28, 1
      %p58 = por %p56, %p57
      %p60 = scmp.ne.s32.totalorder %s45, %s59
      %p61 = scmp.eq.s32.totalorder %s28, 0
      %p62 = por %p60, %p61
      %s63 = ssub.s32 %s30, %s37
      %s64 = ssub.s32 %s29, %s41
      %s65 = sor.u32 %s63, %s64
      %p66 = scmp.eq.s32.totalorder %s65, 0
      %s68 = sadd.s32 %s67, 1
      %s69 = scalar_select %p66, %s67, %s68
      %p72 = pneg %p66
      %p73 = scmp.eq.s32.totalorder %s22, 1
      %p74 = por %p72, %p73
      %p75 = scmp.ne.s32.totalorder %s67, %s70
      %p76 = scmp.eq.s32.totalorder %s22, 0
      %p77 = por %p75, %p76
      %p78 = scmp.ne.s32.totalorder %s67, %s70
      %p79 = scmp.eq.s32.totalorder %s27, 1
      %p80 = por %p78, %p79
      %p81 = scmp.ne.s32.totalorder %s70, %s71
      %p82 = scmp.eq.s32.totalorder %s27, 0
      %p83 = por %p81, %p82
      %p84 = scmp.ne.s32.totalorder %s70, %s71
      %p85 = scmp.eq.s32.totalorder %s28, 1
      %p86 = por %p84, %p85
      %p88 = scmp.ne.s32.totalorder %s71, %s87
      %p89 = scmp.eq.s32.totalorder %s28, 0
      %p90 = por %p88, %p89
      %s91 = ssub.s32 %s30, %s37
      %s92 = ssub.s32 %s29, %s41
      %s93 = sor.u32 %s91, %s92
      %p94 = scmp.eq.s32.totalorder %s93, 0
      %s96 = sadd.s32 %s95, 1
      %s97 = scalar_select %p94, %s95, %s96
      %p100 = pneg %p94
      %p101 = scmp.eq.s32.totalorder %s22, 1
      %p102 = por %p100, %p101
      %p103 = scmp.ne.s32.totalorder %s95, %s98
      %p104 = scmp.eq.s32.totalorder %s22, 0
      %p105 = por %p103, %p104
      %p106 = scmp.ne.s32.totalorder %s95, %s98
      %p107 = scmp.eq.s32.totalorder %s27, 1
      %p108 = por %p106, %p107
      %p109 = scmp.ne.s32.totalorder %s98, %s99
      %p110 = scmp.eq.s32.totalorder %s27, 0
      %p111 = por %p109, %p110
      %p112 = scmp.ne.s32.totalorder %s98, %s99
      %p113 = scmp.eq.s32.totalorder %s28, 1
      %p114 = por %p112, %p113
      %p116 = scmp.ne.s32.totalorder %s99, %s115
      %p117 = scmp.eq.s32.totalorder %s28, 0
      %p118 = por %p116, %p117
      %s119 = ssub.s32 %s29, %s41
      %p120 = scmp.eq.s32.totalorder %s119, 0
      %s122 = sadd.s32 %s121, 1
      %s123 = scalar_select %p120, %s121, %s122
      %p126 = pneg %p120
      %p127 = scmp.eq.s32.totalorder %s22, 1
      %p128 = por %p126, %p127
      %p129 = scmp.ne.s32.totalorder %s121, %s124
      %p130 = scmp.eq.s32.totalorder %s22, 0
      %p131 = por %p129, %p130
      %p132 = scmp.ne.s32.totalorder %s121, %s124
      %p133 = scmp.eq.s32.totalorder %s27, 1
      %p134 = por %p132, %p133
      %p135 = scmp.ne.s32.totalorder %s124, %s125
      %p136 = scmp.eq.s32.totalorder %s27, 0
      %p137 = por %p135, %p136
      %p138 = scmp.ne.s32.totalorder %s124, %s125
      %p139 = scmp.eq.s32.totalorder %s28, 1
      %p140 = por %p138, %p139
      %p142 = scmp.ne.s32.totalorder %s125, %s141
      %p143 = scmp.eq.s32.totalorder %s28, 0
      %p144 = por %p142, %p143
      %s145 = ssub.s32 %s29, %s41
      %p146 = scmp.eq.s32.totalorder %s145, 0
      %s148 = sadd.s32 %s147, 1
      %s149 = scalar_select %p146, %s147, %s148
      %p152 = pneg %p146
      %p153 = scmp.eq.s32.totalorder %s22, 1
      %p154 = por %p152, %p153
      %p155 = scmp.ne.s32.totalorder %s147, %s150
      %p156 = scmp.eq.s32.totalorder %s22, 0
      %p157 = por %p155, %p156
      %p158 = scmp.ne.s32.totalorder %s147, %s150
      %p159 = scmp.eq.s32.totalorder %s27, 1
      %p160 = por %p158, %p159
      %p161 = scmp.ne.s32.totalorder %s150, %s151
      %p162 = scmp.eq.s32.totalorder %s27, 0
      %p163 = por %p161, %p162
      %p164 = scmp.ne.s32.totalorder %s150, %s151
      %p165 = scmp.eq.s32.totalorder %s28, 1
      %p166 = por %p164, %p165
      %p168 = scmp.ne.s32.totalorder %s151, %s167
      %p169 = scmp.eq.s32.totalorder %s28, 0
      %p170 = por %p168, %p169
      %s171 = smul.u32 %s29, 2
      %s172 = sadd.s32 %s171, %s30
      %s173 = smul.u32 %s41, 2
      %s174 = sadd.s32 %s173, %s37
      %s175 = ssub.s32 %s172, %s174
      %p176 = scmp.eq.s32.totalorder %s175, 0
      %s178 = sadd.s32 %s177, 1
      %s179 = scalar_select %p176, %s177, %s178
      %p182 = pneg %p176
      %p183 = scmp.eq.s32.totalorder %s22, 1
      %p184 = por %p182, %p183
      %p185 = scmp.ne.s32.totalorder %s177, %s180
      %p186 = scmp.eq.s32.totalorder %s22, 0
      %p187 = por %p185, %p186
      %p188 = scmp.ne.s32.totalorder %s177, %s180
      %p189 = scmp.eq.s32.totalorder %s27, 1
      %p190 = por %p188, %p189
      %p191 = scmp.ne.s32.totalorder %s180, %s181
      %p192 = scmp.eq.s32.totalorder %s27, 0
      %p193 = por %p191, %p192
      %p194 = scmp.ne.s32.totalorder %s180, %s181
      %p195 = scmp.eq.s32.totalorder %s28, 1
      %p196 = por %p194, %p195
      %p198 = scmp.ne.s32.totalorder %s181, %s197
      %p199 = scmp.eq.s32.totalorder %s28, 0
      %p200 = por %p198, %p199
      %p201 = scmp.le.s32.totalorder 1, %s22
      %p202 = scmp.lt.s32.totalorder %s22, 3
      %p203 = pnand %p201, %p202
      %p204 = pneg %p203
      // Predicated region
      $region9: #{tpu_custom_call.1} parent=5 // pred_check
        _
      $region10: #{tpu_custom_call.1} parent=5 // pred_check_branch
        %206 = sbr.rel (%p203) target = $region12
      $region11: #{tpu_custom_call.1} parent=5 // pred_region
        %s207 = ssub.s32 %s22, 1
        // Predicated region
        $region13: #{tpu_custom_call.1} parent=11 // pred_check
          %p208 = pneg %p55
        $region14: #{tpu_custom_call.1} parent=11 // pred_check_branch
          %210 = sbr.rel (%p208) target = $region16
        $region15: #{tpu_custom_call.1} parent=11 // pred_region
          %s212 = ssub.s32 32, 32
          %213 = vsyncadd [#allocation5], %s212
          %216 = dma.hbm_to_smem %s0, 32, [#allocation2], [#allocation5]
        $region16: #{tpu_custom_call.1} parent=11 // pred_fallthru
          _
        // Predicated region
        $region17: #{tpu_custom_call.1} parent=11 // pred_check
          %p217 = pneg %p137
        $region18: #{tpu_custom_call.1} parent=11 // pred_check_branch
          %219 = sbr.rel (%p217) target = $region20
        $region19: #{tpu_custom_call.1} parent=11 // pred_region
          %s220 = smul.u32 2, %s31
          %s222 = ssub.s32 512, 512
          %223 = vsyncadd [#allocation8], %s222
          %s224 = smul.addr %s220, 2
          %s225 = smul.addr %s224, 128
          %s226 = scalar_lea.hbm %s3, %s225
          %s227 = sshll.u32 [#allocation9], 4
          %s228 = int_to_ptr.vmem [resolvable:$true] %s227
          %233 = dma.hbm_to_vmem [thread:$0]  %s226, 512, %s228, [#allocation8], 256, 256, 16
        $region20: #{tpu_custom_call.1} parent=11 // pred_fallthru
          _
        // Predicated region
        $region21: #{tpu_custom_call.1} parent=11 // pred_check
          %p234 = pneg %p163
        $region22: #{tpu_custom_call.1} parent=11 // pred_check_branch
          %236 = sbr.rel (%p234) target = $region24
        $region23: #{tpu_custom_call.1} parent=11 // pred_region
          %s237 = smul.u32 2, %s31
          %s239 = ssub.s32 512, 512
          %240 = vsyncadd [#allocation11], %s239
          %s241 = smul.addr %s237, 2
          %s242 = smul.addr %s241, 128
          %s243 = scalar_lea.hbm %s4, %s242
          %s244 = sshll.u32 [#allocation10], 4
          %s245 = int_to_ptr.vmem [resolvable:$true] %s244
          %250 = dma.hbm_to_vmem [thread:$0]  %s243, 512, %s245, [#allocation11], 256, 256, 16
        $region24: #{tpu_custom_call.1} parent=11 // pred_fallthru
          _
      $region12: #{tpu_custom_call.1} parent=5 // pred_fallthru
        _
      %p251 = scmp.lt.s32.totalorder %s22, 2
      // Predicated region
      $region25: #{tpu_custom_call.1} parent=5 // pred_check
        %p252 = pneg %p251
      $region26: #{tpu_custom_call.1} parent=5 // pred_check_branch
        %254 = sbr.rel (%p252) target = $region28
      $region27: #{tpu_custom_call.1} parent=5 // pred_region
        // Predicated region
        $region29: #{tpu_custom_call.1} parent=27 // pred_check
          %p255 = pneg %p77
        $region30: #{tpu_custom_call.1} parent=27 // pred_check_branch
          %257 = sbr.rel (%p255) target = $region32
        $region31: #{tpu_custom_call.1} parent=27 // pred_region
          %s258 = sand.u32 %s67, 1
          %s259 = scalar_lea.sflag [#allocation3], %s258
          %s260 = sand.u32 %s67, 1
          %s261 = smul.addr %s260, 32
          %s262 = scalar_lea.vmem [#allocation6], %s261
          %s263 = smul.u32 2, %s29
          %s265 = ssub.s32 512, 512
          %266 = vsyncadd %s259, %s265
          %s267 = smul.addr %s263, 2
          %s268 = smul.addr %s30, 4
          %s269 = sadd.s32 %s267, %s268
          %s270 = smul.addr %s269, 128
          %s271 = scalar_lea.hbm %s1, %s270
          %s272 = sshll.u32 %s262, 4
          %s273 = int_to_ptr.vmem [resolvable:$true] %s272
          %278 = dma.hbm_to_vmem [thread:$0]  %s271, 512, %s273, %s259, 256, 256, 16
        $region32: #{tpu_custom_call.1} parent=27 // pred_fallthru
          _
        // Predicated region
        $region33: #{tpu_custom_call.1} parent=27 // pred_check
          %p279 = pneg %p105
        $region34: #{tpu_custom_call.1} parent=27 // pred_check_branch
          %281 = sbr.rel (%p279) target = $region36
        $region35: #{tpu_custom_call.1} parent=27 // pred_region
          %s282 = sand.u32 %s22, 1
          %s283 = scalar_lea.sflag [#allocation8], %s282
          %s284 = sand.u32 %s95, 1
          %s285 = smul.addr %s284, 96
          %s286 = scalar_lea.vmem [#allocation7], %s285
          %s287 = smul.u32 2, %s29
          %s289 = ssub.s32 1536, 1536
          %290 = vsyncadd %s283, %s289
          %s291 = smul.addr %s287, 2
          %s292 = smul.addr %s30, 12
          %s293 = sadd.s32 %s291, %s292
          %s294 = smul.addr %s293, 128
          %s295 = scalar_lea.hbm %s2, %s294
          %s296 = sshll.u32 %s286, 4
          %s297 = int_to_ptr.vmem [resolvable:$true] %s296
          %302 = dma.hbm_to_vmem [thread:$0]  %s295, 1536, %s297, %s283, 256, 256, 16
        $region36: #{tpu_custom_call.1} parent=27 // pred_fallthru
          _
      $region28: #{tpu_custom_call.1} parent=5 // pred_fallthru
        _
      %p303 = scmp.le.s32.totalorder 1, %s22
      %p304 = scmp.lt.s32.totalorder %s22, 3
      %p305 = pnand %p303, %p304
      %p306 = pneg %p305
      // Predicated region
      $region37: #{tpu_custom_call.1} parent=5 // pred_check
        _
      $region38: #{tpu_custom_call.1} parent=5 // pred_check_branch
        %308 = sbr.rel (%p305) target = $region40
      $region39: #{tpu_custom_call.1} parent=5 // pred_region
        %s309 = ssub.s32 %s22, 1
        // Predicated region
        $region41: #{tpu_custom_call.1} parent=39 // pred_check
          %p310 = pneg %p55
        $region42: #{tpu_custom_call.1} parent=39 // pred_check_branch
          %312 = sbr.rel (%p310) target = $region44
        $region43: #{tpu_custom_call.1} parent=39 // pred_region
          %313 = dma.done [#allocation5], 32
        $region44: #{tpu_custom_call.1} parent=39 // pred_fallthru
          _
        %s314 = sand.u32 %s70, 1
        %s315 = scalar_lea.sflag [#allocation3], %s314
        %s316 = sand.u32 %s70, 1
        %s317 = smul.addr %s316, 32
        %s318 = scalar_lea.vmem [#allocation6], %s317
        // Predicated region
        $region45: #{tpu_custom_call.1} parent=39 // pred_check
          %p319 = pneg %p83
        $region46: #{tpu_custom_call.1} parent=39 // pred_check_branch
          %321 = sbr.rel (%p319) target = $region48
        $region47: #{tpu_custom_call.1} parent=39 // pred_region
          %322 = dma.done %s315, 512
        $region48: #{tpu_custom_call.1} parent=39 // pred_fallthru
          _
        %s323 = sand.u32 %s27, 1
        %s324 = scalar_lea.sflag [#allocation8], %s323
        %s325 = sand.u32 %s98, 1
        %s326 = smul.addr %s325, 96
        %s327 = scalar_lea.vmem [#allocation7], %s326
        // Predicated region
        $region49: #{tpu_custom_call.1} parent=39 // pred_check
          %p328 = pneg %p111
        $region50: #{tpu_custom_call.1} parent=39 // pred_check_branch
          %330 = sbr.rel (%p328) target = $region52
        $region51: #{tpu_custom_call.1} parent=39 // pred_region
          %331 = dma.done %s324, 1536
        $region52: #{tpu_custom_call.1} parent=39 // pred_fallthru
          _
        // Predicated region
        $region53: #{tpu_custom_call.1} parent=39 // pred_check
          %p332 = pneg %p137
        $region54: #{tpu_custom_call.1} parent=39 // pred_check_branch
          %334 = sbr.rel (%p332) target = $region56
        $region55: #{tpu_custom_call.1} parent=39 // pred_region
          %335 = dma.done [#allocation8], 512
        $region56: #{tpu_custom_call.1} parent=39 // pred_fallthru
          _
        // Predicated region
        $region57: #{tpu_custom_call.1} parent=39 // pred_check
          %p336 = pneg %p163
        $region58: #{tpu_custom_call.1} parent=39 // pred_check_branch
          %338 = sbr.rel (%p336) target = $region60
        $region59: #{tpu_custom_call.1} parent=39 // pred_region
          %339 = dma.done [#allocation11], 512
        $region60: #{tpu_custom_call.1} parent=39 // pred_fallthru
          _
        %340 = sfence
        %p341 = pneg %p55
        %p342 = pneg %p52
        %s343 = sand.u32 %s70, 1
        %s344 = scalar_lea.sflag [#allocation3], %s343
        %s345 = sand.u32 %s70, 1
        %s346 = smul.addr %s345, 32
        %s347 = scalar_lea.vmem [#allocation6], %s346
        %p348 = pneg %p83
        %p349 = pneg %p80
        %s350 = sand.u32 %s27, 1
        %s351 = scalar_lea.sflag [#allocation8], %s350
        %s352 = sand.u32 %s98, 1
        %s353 = smul.addr %s352, 96
        %s354 = scalar_lea.vmem [#allocation7], %s353
        %p355 = pneg %p111
        %p356 = pneg %p108
        %p357 = pneg %p137
        %p358 = pneg %p134
        %p359 = pneg %p163
        %p360 = pneg %p160
        %p361 = pneg %p193
        %p362 = pneg %p190
        %s363 = sand.u32 %s180, 1
        %s364 = scalar_lea.sflag [#allocation4], %s363
        %s365 = sand.u32 %s180, 1
        %s366 = smul.addr %s365, 16
        %s367 = scalar_lea.vmem [#allocation12], %s366
        %s368 = smul.u32 2, %s31
        %s369 = smul.u32 2, %s31
        %s370 = smul.u32 2, %s31
        %s371 = smul.u32 2, %s31
        %s372 = smul.u32 %s31, 2
        %s373 = sadd.s32 %s372, %s32
        %s374 = smul.u32 %s32, 128
        %s375 = sld [smem:[#allocation2 + %s374]]
        %s376 = sadd.s32 %s374, 1
        %s377 = sld [smem:[#allocation2 + %s376]]
        %s378 = sadd.s32 %s374, 2
        %s379 = sld [smem:[#allocation2 + %s378]]
        %s380 = sadd.s32 %s374, 3
        %s381 = sld [smem:[#allocation2 + %s380]]
        %s382 = smul.u32 0, 2
        %s383 = smul.addr %s382, 8
        %s384 = scalar_lea.vmem %s318, %s383 [#allocation6]
        %v385 = vld [vmem:[%s384] sm:$0xff]
        %v386 = vld [vmem:[%s384 + $0x8] sm:$0xff]
        %s387 = smul.addr %s382, 8
        %s388 = scalar_lea.vmem %s327, %s387 [#allocation7]
        %v389 = vld [vmem:[%s388] sm:$0xff]
        %v390 = vld [vmem:[%s388 + $0x8] sm:$0xff]
        %s391 = sadd.s32 %s382, 4
        %s392 = smul.addr %s391, 8
        %s393 = scalar_lea.vmem %s327, %s392 [#allocation7]
        %v394 = vld [vmem:[%s393] sm:$0xff]
        %v395 = vld [vmem:[%s393 + $0x8] sm:$0xff]
        %s396 = sadd.s32 %s382, 8
        %s397 = smul.addr %s396, 8
        %s398 = scalar_lea.vmem %s327, %s397 [#allocation7]
        %v399 = vld [vmem:[%s398] sm:$0xff]
        %v400 = vld [vmem:[%s398 + $0x8] sm:$0xff]
        %s401 = smul.addr %s382, 8
        %s402 = scalar_lea.vmem [#allocation10], %s401
        %v403 = vld [vmem:[%s402] sm:$0xff]
        %v404 = vld [vmem:[%s402 + $0x8] sm:$0xff]
        %s405 = smul.addr %s382, 8
        %s406 = scalar_lea.vmem [#allocation9], %s405
        %v407 = vld [vmem:[%s406] sm:$0xff]
        %v408 = vld [vmem:[%s406 + $0x8] sm:$0xff]
        %v409 = vstv %s375
        %v410 = vsub.f32 %v403, %v409
        %v411 = vsub.f32 %v404, %v409
        %v412 = vmul.f32 %v410, %v385
        %v413 = vmul.f32 %v411, %v386
        %v414 = vstv %s379
        %v415 = vmul.f32 %v412, %v414
        %v416 = vmul.f32 %v413, %v414
        %v417 = vstv %s377
        %v418 = vsub.f32 %v407, %v417
        %v419 = vsub.f32 %v408, %v417
        %v420 = vmul.f32 %v418, %v385
        %v421 = vmul.f32 %v419, %v386
        %v422 = vstv %s381
        %v423 = vmul.f32 %v420, %v422
        %v424 = vmul.f32 %v421, %v422
        %vm425 = vcmp.gt.f32.partialorder %v399, 1e-05
        %vm426 = vcmp.gt.f32.partialorder %v400, 1e-05
        %v427 = vsub.f32 %v415, %v389
        %v428 = vsub.f32 %v416, %v390
        %v429 = vand.u32 2147483647, %v427
        %v430 = vand.u32 2147483647, %v428
        %vm431 = vcmp.lt.f32.partialorder %v429, 1.0
        %vm432 = vcmp.lt.f32.partialorder %v430, 1.0
        %v433 = vmul.f32 %v427, 0.5
        %v434 = vmul.f32 %v428, 0.5
        %v435 = vmul.f32 %v433, %v427
        %v436 = vmul.f32 %v434, %v428
        %v437 = vsub.f32 %v429, 0.5
        %v438 = vsub.f32 %v430, 0.5
        %v439 = vsel %vm431, %v435, %v437
        %v440 = vsel %vm432, %v436, %v438
        %v441 = vsub.f32 %v423, %v394
        %v442 = vsub.f32 %v424, %v395
        %v443 = vand.u32 2147483647, %v441
        %v444 = vand.u32 2147483647, %v442
        %vm445 = vcmp.lt.f32.partialorder %v443, 1.0
        %vm446 = vcmp.lt.f32.partialorder %v444, 1.0
        %v447 = vmul.f32 %v441, 0.5
        %v448 = vmul.f32 %v442, 0.5
        %v449 = vmul.f32 %v447, %v441
        %v450 = vmul.f32 %v448, %v442
        %v451 = vsub.f32 %v443, 0.5
        %v452 = vsub.f32 %v444, 0.5
        %v453 = vsel %vm445, %v449, %v451
        %v454 = vsel %vm446, %v450, %v452
        %v455 = vadd.f32 %v439, %v453
        %v456 = vadd.f32 %v440, %v454
        %v457 = vsub.f32 %v385, %v399
        %v458 = vsub.f32 %v386, %v400
        %v459 = vand.u32 2147483647, %v457
        %v460 = vand.u32 2147483647, %v458
        %vm461 = vcmp.lt.f32.partialorder %v459, 1.0
        %vm462 = vcmp.lt.f32.partialorder %v460, 1.0
        %v463 = vmul.f32 %v457, 0.5
        %v464 = vmul.f32 %v458, 0.5
        %v465 = vmul.f32 %v463, %v457
        %v466 = vmul.f32 %v464, %v458
        %v467 = vsub.f32 %v459, 0.5
        %v468 = vsub.f32 %v460, 0.5
        %v469 = vsel %vm461, %v465, %v467
        %v470 = vsel %vm462, %v466, %v468
        %v471 = vadd.f32 %v455, %v469
        %v472 = vadd.f32 %v456, %v470
        %v473 = vsel %vm425, %v471, 0.0
        %v474 = vsel %vm426, %v472, 0.0
        %v475 = vadd.f32 %v473, 0.0
        %v476 = vadd.f32 %v474, 0.0
        %v477 = vsel %vm425, 1.0, 0.0
        %v478 = vsel %vm426, 1.0, 0.0
        %v479 = vadd.f32 %v477, 0.0
        %v480 = vadd.f32 %v478, 0.0
        %s481 = smul.u32 1, 2
        %s482 = smul.addr %s481, 8
        %s483 = scalar_lea.vmem %s318, %s482 [#allocation6]
        %v484 = vld [vmem:[%s483] sm:$0xff]
        %v485 = vld [vmem:[%s483 + $0x8] sm:$0xff]
        %s486 = smul.addr %s481, 8
        %s487 = scalar_lea.vmem %s327, %s486 [#allocation7]
        %v488 = vld [vmem:[%s487] sm:$0xff]
        %v489 = vld [vmem:[%s487 + $0x8] sm:$0xff]
        %s490 = sadd.s32 %s481, 4
        %s491 = smul.addr %s490, 8
        %s492 = scalar_lea.vmem %s327, %s491 [#allocation7]
        %v493 = vld [vmem:[%s492] sm:$0xff]
        %v494 = vld [vmem:[%s492 + $0x8] sm:$0xff]
        %s495 = sadd.s32 %s481, 8
        %s496 = smul.addr %s495, 8
        %s497 = scalar_lea.vmem %s327, %s496 [#allocation7]
        %v498 = vld [vmem:[%s497] sm:$0xff]
        %v499 = vld [vmem:[%s497 + $0x8] sm:$0xff]
        %s500 = smul.addr %s481, 8
        %s501 = scalar_lea.vmem [#allocation10], %s500
        %v502 = vld [vmem:[%s501] sm:$0xff]
        %v503 = vld [vmem:[%s501 + $0x8] sm:$0xff]
        %s504 = smul.addr %s481, 8
        %s505 = scalar_lea.vmem [#allocation9], %s504
        %v506 = vld [vmem:[%s505] sm:$0xff]
        %v507 = vld [vmem:[%s505 + $0x8] sm:$0xff]
        %v508 = vsub.f32 %v502, %v409
        %v509 = vsub.f32 %v503, %v409
        %v510 = vmul.f32 %v508, %v484
        %v511 = vmul.f32 %v509, %v485
        %v512 = vmul.f32 %v510, %v414
        %v513 = vmul.f32 %v511, %v414
        %v514 = vsub.f32 %v506, %v417
        %v515 = vsub.f32 %v507, %v417
        %v516 = vmul.f32 %v514, %v484
        %v517 = vmul.f32 %v515, %v485
        %v518 = vmul.f32 %v516, %v422
        %v519 = vmul.f32 %v517, %v422
        %vm520 = vcmp.gt.f32.partialorder %v498, 1e-05
        %vm521 = vcmp.gt.f32.partialorder %v499, 1e-05
        %v522 = vsub.f32 %v512, %v488
        %v523 = vsub.f32 %v513, %v489
        %v524 = vand.u32 2147483647, %v522
        %v525 = vand.u32 2147483647, %v523
        %vm526 = vcmp.lt.f32.partialorder %v524, 1.0
        %vm527 = vcmp.lt.f32.partialorder %v525, 1.0
        %v528 = vmul.f32 %v522, 0.5
        %v529 = vmul.f32 %v523, 0.5
        %v530 = vmul.f32 %v528, %v522
        %v531 = vmul.f32 %v529, %v523
        %v532 = vsub.f32 %v524, 0.5
        %v533 = vsub.f32 %v525, 0.5
        %v534 = vsel %vm526, %v530, %v532
        %v535 = vsel %vm527, %v531, %v533
        %v536 = vsub.f32 %v518, %v493
        %v537 = vsub.f32 %v519, %v494
        %v538 = vand.u32 2147483647, %v536
        %v539 = vand.u32 2147483647, %v537
        %vm540 = vcmp.lt.f32.partialorder %v538, 1.0
        %vm541 = vcmp.lt.f32.partialorder %v539, 1.0
        %v542 = vmul.f32 %v536, 0.5
        %v543 = vmul.f32 %v537, 0.5
        %v544 = vmul.f32 %v542, %v536
        %v545 = vmul.f32 %v543, %v537
        %v546 = vsub.f32 %v538, 0.5
        %v547 = vsub.f32 %v539, 0.5
        %v548 = vsel %vm540, %v544, %v546
        %v549 = vsel %vm541, %v545, %v547
        %v550 = vadd.f32 %v534, %v548
        %v551 = vadd.f32 %v535, %v549
        %v552 = vsub.f32 %v484, %v498
        %v553 = vsub.f32 %v485, %v499
        %v554 = vand.u32 2147483647, %v552
        %v555 = vand.u32 2147483647, %v553
        %vm556 = vcmp.lt.f32.partialorder %v554, 1.0
        %vm557 = vcmp.lt.f32.partialorder %v555, 1.0
        %v558 = vmul.f32 %v552, 0.5
        %v559 = vmul.f32 %v553, 0.5
        %v560 = vmul.f32 %v558, %v552
        %v561 = vmul.f32 %v559, %v553
        %v562 = vsub.f32 %v554, 0.5
        %v563 = vsub.f32 %v555, 0.5
        %v564 = vsel %vm556, %v560, %v562
        %v565 = vsel %vm557, %v561, %v563
        %v566 = vadd.f32 %v550, %v564
        %v567 = vadd.f32 %v551, %v565
        %v568 = vsel %vm520, %v566, 0.0
        %v569 = vsel %vm521, %v567, 0.0
        %v570 = vadd.f32 %v475, %v568
        %v571 = vadd.f32 %v476, %v569
        %v572 = vsel %vm520, 1.0, 0.0
        %v573 = vsel %vm521, 1.0, 0.0
        %v574 = vadd.f32 %v479, %v572
        %v575 = vadd.f32 %v480, %v573
        %v576 = vadd.f32 %v570, %v571
        %577 = vst [vmem:[%s367] sm:$0xff] %v576
        %v578 = vadd.f32 %v574, %v575
        %s579 = scalar_lea.vmem %s367, 8 [#allocation12]
        %580 = vst [vmem:[%s579] sm:$0xff] %v578
        %s581 = sand.u32 %s180, 1
        %s582 = scalar_lea.sflag [#allocation4], %s581
        %s583 = sand.u32 %s180, 1
        %s584 = smul.addr %s583, 16
        %s585 = scalar_lea.vmem [#allocation12], %s584
        // Predicated region
        $region61: #{tpu_custom_call.1} parent=39 // pred_check
          %p586 = pneg %p190
        $region62: #{tpu_custom_call.1} parent=39 // pred_check_branch
          %588 = sbr.rel (%p586) target = $region64
        $region63: #{tpu_custom_call.1} parent=39 // pred_region
          %s589 = smul.u32 %s31, 2
          %s590 = sadd.s32 %s589, %s32
          %s592 = ssub.s32 256, 256
          %593 = vsyncadd %s582, %s592
          %s594 = smul.addr %s590, 2
          %s595 = smul.addr %s594, 128
          %s596 = scalar_lea.hbm %s5, %s595
          %s597 = sshll.u32 %s585, 4
          %s598 = int_to_ptr.vmem [resolvable:$true] %s597
          %603 = dma.vmem_to_hbm [thread:$0]  %s598, 256, %s596, %s582, 128, 128, 8
        $region64: #{tpu_custom_call.1} parent=39 // pred_fallthru
          _
      $region40: #{tpu_custom_call.1} parent=5 // pred_fallthru
        _
      %p604 = scmp.le.s32.totalorder 2, %s22
      // Predicated region
      $region65: #{tpu_custom_call.1} parent=5 // pred_check
        %p605 = pneg %p604
      $region66: #{tpu_custom_call.1} parent=5 // pred_check_branch
        %607 = sbr.rel (%p605) target = $region68
      $region67: #{tpu_custom_call.1} parent=5 // pred_region
        %s608 = ssub.s32 %s22, 2
        // Predicated region
        $region69: #{tpu_custom_call.1} parent=67 // pred_check
          %p609 = pneg %p196
        $region70: #{tpu_custom_call.1} parent=67 // pred_check_branch
          %611 = sbr.rel (%p609) target = $region72
        $region71: #{tpu_custom_call.1} parent=67 // pred_region
          %s612 = sand.u32 %s181, 1
          %s613 = scalar_lea.sflag [#allocation4], %s612
          %s614 = sand.u32 %s181, 1
          %s615 = smul.addr %s614, 16
          %s616 = scalar_lea.vmem [#allocation12], %s615
          %617 = dma.done %s613, 256
        $region72: #{tpu_custom_call.1} parent=67 // pred_fallthru
          _
      $region68: #{tpu_custom_call.1} parent=5 // pred_fallthru
        _
    $region6: #{tpu_custom_call.1} parent=1 // loop_footer
      %s26 = sadd.s32 1, %s22
    $region7: #{tpu_custom_call.1} parent=1 // loop_footer_branch
      %21 = sbr.rel target = $region3
    $region8: #{tpu_custom_call.1} parent=1 // loop_exit
      _
    %618 = vsyncpa [#allocation3], 1
    %s619 = scalar_lea.sflag [#allocation3], 1
    %620 = vsyncpa %s619, 1
    %621 = vsyncpa [#allocation8], 1
    %s622 = scalar_lea.sflag [#allocation8], 1
    %623 = vsyncpa %s622, 1
    %624 = vsyncpa [#allocation11], 1
    %625 = vsyncpa [#allocation4], 1
    %s626 = scalar_lea.sflag [#allocation4], 1
    %627 = vsyncpa %s626, 1
    %628 = vsyncpa [#allocation5], 1
    %s629 = scalar_lea.sflag [#allocation5], 1
    %630 = vsyncpa %s629, 1

</llo_original>
